<compile_context>
chip_gen: v6e
topology: v6e:2x2x1
jax: 0.10.0
libtpu: 0.0.40
codegen_flags: <defaults>
</compile_context>

<pallas_src>
import functools

import jax
import jax.numpy as jnp
from jax import lax
from jax.experimental import pallas as pl
from jax.experimental.pallas import tpu as pltpu

G = 6.6743e-20
M_EARTH = 5.972e+24
M_MOON = 7.342e+22

LAMBDA_DATA = 1.0
LAMBDA_PHYSICS = 0.1
ADAPTIVE_WEIGHTING = True


def _piloss_kernel(scalars_ref, slab_ref, out_ref, *, inv_n, lambda_data):
    """scalars_ref: (3,) f32 SMEM  = [dt, 0.5*dt*dt, physics_weight]
       slab_ref:    (5, 3, B) f32 VMEM = [pred, true, prev_pos, prev_vel, moon],
                    each field lane-dense (xyz on sublanes, batch on lanes)
       out_ref:     (3,) f32 SMEM = [total_loss, data_loss, physics_loss]
    """
    dt = scalars_ref[0]
    half_dt2 = scalars_ref[1]
    physics_weight = scalars_ref[2]

    pred = slab_ref[0]          # (3, B)
    true = slab_ref[1]
    prev = slab_ref[2]
    vel = slab_ref[3]
    moon = slab_ref[4]

    # ---- two-body gravitational acceleration (VPU + EUP only) ----
    px = prev[0:1, :]
    py = prev[1:2, :]
    pz = prev[2:3, :]
    earth_r2 = px * px + py * py + pz * pz              # (1, B)
    inv_er = lax.rsqrt(earth_r2)                        # EUP approx
    inv_er = inv_er * (1.5 - 0.5 * earth_r2 * inv_er * inv_er)   # NR refine
    inv_er3 = inv_er * inv_er * inv_er                  # 1 / r^3

    mvec = moon - prev                                  # (3, B)
    mx = mvec[0:1, :]
    my = mvec[1:2, :]
    mz = mvec[2:3, :]
    moon_r2 = mx * mx + my * my + mz * mz               # (1, B)
    inv_mr = lax.rsqrt(moon_r2)
    inv_mr = inv_mr * (1.5 - 0.5 * moon_r2 * inv_mr * inv_mr)
    inv_mr3 = inv_mr * inv_mr * inv_mr

    # NOTE: like the reference module, no epsilon is added — a zero radius
    # (spacecraft at the origin / at the moon) yields inf/nan exactly as torch.
    total_acc = (G * M_EARTH) * prev * inv_er3 + (G * M_MOON) * mvec * inv_mr3
    physics_pred = prev + vel * dt + half_dt2 * total_acc

    # ---- losses: per-lane partial sums (VPU adds), then tiny lane reduces ----
    d = pred - true
    pd = pred - physics_pred
    d2 = d * d
    pd2 = pd * pd
    row_d = d2[0:1, :] + d2[1:2, :] + d2[2:3, :]        # (1, B)
    row_pd = pd2[0:1, :] + pd2[1:2, :] + pd2[2:3, :]    # (1, B)

    data_loss = jnp.sum(row_d) * inv_n
    physics_loss = jnp.sum(row_pd) * inv_n
    total_loss = lambda_data * data_loss + physics_weight * physics_loss

    out_ref[0] = total_loss
    out_ref[1] = data_loss
    out_ref[2] = physics_loss


def physics_informed_loss(pred_pos, true_pos, sc_prev_pos, sc_prev_vel,
                          moon_pos, dt, mission_phase=None,
                          lambda_data=LAMBDA_DATA,
                          lambda_physics=LAMBDA_PHYSICS,
                          adaptive_weighting=ADAPTIVE_WEIGHTING):
    """Wrapper: one packed lane-dense slab (one DMA), SMEM scalars in/out."""
    b = pred_pos.shape[0]

    # One fused producer: stack -> (5, B, 3) -> transpose -> (5, 3, B).
    # Single VMEM operand => single HBM->VMEM copy descriptor.
    slab = jnp.stack(
        [jnp.asarray(pred_pos, jnp.float32),
         jnp.asarray(true_pos, jnp.float32),
         jnp.asarray(sc_prev_pos, jnp.float32),
         jnp.asarray(sc_prev_vel, jnp.float32),
         jnp.asarray(moon_pos, jnp.float32)],
        axis=0).transpose(0, 2, 1)                       # (5, 3, B)

    dt_f = jnp.asarray(dt, jnp.float32).reshape(())

    # Adaptive physics weight is a pure function of the phase distribution:
    # compute it host-side (mirrors the torch where-chain exactly) and pass
    # one scalar instead of a (1, B) int32 operand.
    if bool(adaptive_weighting) and mission_phase is not None:
        ph = jnp.asarray(mission_phase)
        w = jnp.ones(ph.shape, jnp.float32)
        w = jnp.where(ph == 0, jnp.float32(2.0), w)
        w = jnp.where(ph == 2, jnp.float32(1.5), w)
        w = jnp.where(ph == 1, jnp.float32(0.5), w)
        physics_weight = jnp.float32(lambda_physics) * jnp.mean(w)
    else:
        physics_weight = jnp.float32(lambda_physics)

    scalars = jnp.stack([dt_f, 0.5 * dt_f * dt_f, physics_weight])  # (3,) f32

    kernel = functools.partial(
        _piloss_kernel,
        inv_n=1.0 / float(b * 3),
        lambda_data=float(lambda_data),
    )

    out = pl.pallas_call(
        kernel,
        out_shape=jax.ShapeDtypeStruct((3,), jnp.float32),
        in_specs=[pl.BlockSpec(memory_space=pltpu.MemorySpace.SMEM),
                  pl.BlockSpec(memory_space=pltpu.MemorySpace.VMEM)],
        out_specs=pl.BlockSpec(memory_space=pltpu.MemorySpace.SMEM),
    )(scalars, slab)

    # TODO(synk): if batch ever scales to thousands, add a 1-D "parallel" grid
    # over the lane axis (tiles in multiples of 128, VMEM sized for v7x's
    # 64 MiB) so both v7x TensorCores split the work; at batch=8 a grid is
    # pure serial-loop overhead.
    return out[0], out[1], out[2]


def _reference(pred_pos, true_pos, sc_prev_pos, sc_prev_vel, moon_pos, dt, mission_phase):
    """Pure-JAX reference mirroring the PyTorch module."""
    data_loss = jnp.mean((pred_pos - true_pos) ** 2)
    earth_r = jnp.sqrt(jnp.sum(sc_prev_pos ** 2, axis=1, keepdims=True))
    moon_r_vec = moon_pos - sc_prev_pos
    moon_r = jnp.sqrt(jnp.sum(moon_r_vec ** 2, axis=1, keepdims=True))
    earth_acc = G * M_EARTH * sc_prev_pos / earth_r ** 3
    moon_acc = G * M_MOON * moon_r_vec / moon_r ** 3
    total_acc = earth_acc + moon_acc
    physics_pred = sc_prev_pos + sc_prev_vel * dt + 0.5 * total_acc * dt ** 2
    physics_loss = jnp.mean((pred_pos - physics_pred) ** 2)
    w = jnp.ones_like(mission_phase, dtype=jnp.float32)
    w = jnp.where(mission_phase == 0, 2.0, w)
    w = jnp.where(mission_phase == 2, 1.5, w)
    w = jnp.where(mission_phase == 1, 0.5, w)
    physics_weight = LAMBDA_PHYSICS * jnp.mean(w)
    total = LAMBDA_DATA * data_loss + physics_weight * physics_loss
    return total, data_loss, physics_loss


if __name__ == "__main__":
    key = jax.random.PRNGKey(0)
    k1, k2, k3, k4, k5, k6 = jax.random.split(key, 6)

    batch = 8
    # Positions in km-ish scale (LEO ~7000 km, Moon ~384400 km).
    true_pos = 7000.0 + 500.0 * jax.random.normal(k1, (batch, 3), dtype=jnp.float32)
    pred_pos = true_pos + 10.0 * jax.random.normal(k2, (batch, 3), dtype=jnp.float32)
    sc_prev_pos = true_pos + 50.0 * jax.random.normal(k3, (batch, 3), dtype=jnp.float32)
    sc_prev_vel = 7.5 * jax.random.normal(k4, (batch, 3), dtype=jnp.float32)
    moon_pos = 384400.0 + 1000.0 * jax.random.normal(k5, (batch, 3), dtype=jnp.float32)
    mission_phase = jax.random.randint(k6, (batch,), 0, 3, dtype=jnp.int32)
    dt = 60.0

    total, data_l, phys_l = physics_informed_loss(
        pred_pos, true_pos, sc_prev_pos, sc_prev_vel, moon_pos, dt, mission_phase)
    jax.block_until_ready((total, data_l, phys_l))

    # Sanity-check against pure-JAX reference.
    r_total, r_data, r_phys = _reference(
        pred_pos, true_pos, sc_prev_pos, sc_prev_vel, moon_pos, dt, mission_phase)
    assert jnp.allclose(total, r_total, rtol=1e-5, atol=1e-5), (total, r_total)
    assert jnp.allclose(data_l, r_data, rtol=1e-5, atol=1e-5), (data_l, r_data)
    assert jnp.allclose(phys_l, r_phys, rtol=1e-5, atol=1e-5), (phys_l, r_phys)

    print("KERNEL_OK")
</pallas_src>

<mosaic_0001>
module attributes {stable_mosaic.version = 11 : i64} {
  func.func @_piloss_kernel(%arg0: memref<3xf32, #tpu.memory_space<smem>>, %arg1: memref<5x3x8xf32, #tpu.memory_space<vmem>>, %arg2: memref<3xf32, #tpu.memory_space<smem>>) attributes {dimension_semantics = [], scalar_prefetch = 0 : i64, scratch_operands = 0 : i64, tpu.core_type = #tpu.core_type<tc>} {
    %c0 = arith.constant 0 : index
    %0 = memref.load %arg0[%c0] : memref<3xf32, #tpu.memory_space<smem>>
    %c1 = arith.constant 1 : index
    %1 = memref.load %arg0[%c1] : memref<3xf32, #tpu.memory_space<smem>>
    %c2 = arith.constant 2 : index
    %2 = memref.load %arg0[%c2] : memref<3xf32, #tpu.memory_space<smem>>
    %c0_0 = arith.constant 0 : index
    %c0_1 = arith.constant 0 : index
    %c0_2 = arith.constant 0 : index
    %3 = vector.load %arg1[%c0_0, %c0_1, %c0_2] : memref<5x3x8xf32, #tpu.memory_space<vmem>>, vector<1x3x8xf32>
    %4 = vector.shape_cast %3 : vector<1x3x8xf32> to vector<3x8xf32>
    %c1_3 = arith.constant 1 : index
    %c0_4 = arith.constant 0 : index
    %c0_5 = arith.constant 0 : index
    %5 = vector.load %arg1[%c1_3, %c0_4, %c0_5] : memref<5x3x8xf32, #tpu.memory_space<vmem>>, vector<1x3x8xf32>
    %6 = vector.shape_cast %5 : vector<1x3x8xf32> to vector<3x8xf32>
    %c2_6 = arith.constant 2 : index
    %c0_7 = arith.constant 0 : index
    %c0_8 = arith.constant 0 : index
    %7 = vector.load %arg1[%c2_6, %c0_7, %c0_8] : memref<5x3x8xf32, #tpu.memory_space<vmem>>, vector<1x3x8xf32>
    %8 = vector.shape_cast %7 : vector<1x3x8xf32> to vector<3x8xf32>
    %c3 = arith.constant 3 : index
    %c0_9 = arith.constant 0 : index
    %c0_10 = arith.constant 0 : index
    %9 = vector.load %arg1[%c3, %c0_9, %c0_10] : memref<5x3x8xf32, #tpu.memory_space<vmem>>, vector<1x3x8xf32>
    %10 = vector.shape_cast %9 : vector<1x3x8xf32> to vector<3x8xf32>
    %c4 = arith.constant 4 : index
    %c0_11 = arith.constant 0 : index
    %c0_12 = arith.constant 0 : index
    %11 = vector.load %arg1[%c4, %c0_11, %c0_12] : memref<5x3x8xf32, #tpu.memory_space<vmem>>, vector<1x3x8xf32>
    %12 = vector.shape_cast %11 : vector<1x3x8xf32> to vector<3x8xf32>
    %13 = vector.extract_strided_slice %8 {offsets = [0, 0], sizes = [1, 8], strides = [1, 1]} : vector<3x8xf32> to vector<1x8xf32>
    %14 = vector.extract_strided_slice %8 {offsets = [1, 0], sizes = [1, 8], strides = [1, 1]} : vector<3x8xf32> to vector<1x8xf32>
    %15 = vector.extract_strided_slice %8 {offsets = [2, 0], sizes = [1, 8], strides = [1, 1]} : vector<3x8xf32> to vector<1x8xf32>
    %16 = arith.mulf %13, %13 : vector<1x8xf32>
    %17 = arith.mulf %14, %14 : vector<1x8xf32>
    %18 = arith.addf %16, %17 : vector<1x8xf32>
    %19 = arith.mulf %15, %15 : vector<1x8xf32>
    %20 = arith.addf %18, %19 : vector<1x8xf32>
    %21 = math.rsqrt %20 : vector<1x8xf32>
    %cst = arith.constant 5.000000e-01 : f32
    %22 = vector.broadcast %cst : f32 to vector<1x8xf32>
    %23 = arith.mulf %22, %20 : vector<1x8xf32>
    %24 = arith.mulf %23, %21 : vector<1x8xf32>
    %25 = arith.mulf %24, %21 : vector<1x8xf32>
    %cst_13 = arith.constant 1.500000e+00 : f32
    %26 = vector.broadcast %cst_13 : f32 to vector<1x8xf32>
    %27 = arith.subf %26, %25 : vector<1x8xf32>
    %28 = arith.mulf %21, %27 : vector<1x8xf32>
    %29 = arith.mulf %28, %28 : vector<1x8xf32>
    %30 = arith.mulf %29, %28 : vector<1x8xf32>
    %31 = arith.subf %12, %8 : vector<3x8xf32>
    %32 = vector.extract_strided_slice %31 {offsets = [0, 0], sizes = [1, 8], strides = [1, 1]} : vector<3x8xf32> to vector<1x8xf32>
    %33 = vector.extract_strided_slice %31 {offsets = [1, 0], sizes = [1, 8], strides = [1, 1]} : vector<3x8xf32> to vector<1x8xf32>
    %34 = vector.extract_strided_slice %31 {offsets = [2, 0], sizes = [1, 8], strides = [1, 1]} : vector<3x8xf32> to vector<1x8xf32>
    %35 = arith.mulf %32, %32 : vector<1x8xf32>
    %36 = arith.mulf %33, %33 : vector<1x8xf32>
    %37 = arith.addf %35, %36 : vector<1x8xf32>
    %38 = arith.mulf %34, %34 : vector<1x8xf32>
    %39 = arith.addf %37, %38 : vector<1x8xf32>
    %40 = math.rsqrt %39 : vector<1x8xf32>
    %cst_14 = arith.constant 5.000000e-01 : f32
    %41 = vector.broadcast %cst_14 : f32 to vector<1x8xf32>
    %42 = arith.mulf %41, %39 : vector<1x8xf32>
    %43 = arith.mulf %42, %40 : vector<1x8xf32>
    %44 = arith.mulf %43, %40 : vector<1x8xf32>
    %cst_15 = arith.constant 1.500000e+00 : f32
    %45 = vector.broadcast %cst_15 : f32 to vector<1x8xf32>
    %46 = arith.subf %45, %44 : vector<1x8xf32>
    %47 = arith.mulf %40, %46 : vector<1x8xf32>
    %48 = arith.mulf %47, %47 : vector<1x8xf32>
    %49 = arith.mulf %48, %47 : vector<1x8xf32>
    %cst_16 = arith.constant 398589.188 : f32
    %50 = vector.broadcast %cst_16 : f32 to vector<3x8xf32>
    %51 = arith.mulf %50, %8 : vector<3x8xf32>
    %52 = vector.broadcast %30 : vector<1x8xf32> to vector<3x8xf32>
    %53 = arith.mulf %51, %52 : vector<3x8xf32>
    %cst_17 = arith.constant 4900.271 : f32
    %54 = vector.broadcast %cst_17 : f32 to vector<3x8xf32>
    %55 = arith.mulf %54, %31 : vector<3x8xf32>
    %56 = vector.broadcast %49 : vector<1x8xf32> to vector<3x8xf32>
    %57 = arith.mulf %55, %56 : vector<3x8xf32>
    %58 = arith.addf %53, %57 : vector<3x8xf32>
    %59 = vector.broadcast %0 : f32 to vector<3x8xf32>
    %60 = arith.mulf %10, %59 : vector<3x8xf32>
    %61 = arith.addf %8, %60 : vector<3x8xf32>
    %62 = vector.broadcast %1 : f32 to vector<3x8xf32>
    %63 = arith.mulf %62, %58 : vector<3x8xf32>
    %64 = arith.addf %61, %63 : vector<3x8xf32>
    %65 = arith.subf %4, %6 : vector<3x8xf32>
    %66 = arith.subf %4, %64 : vector<3x8xf32>
    %67 = arith.mulf %65, %65 : vector<3x8xf32>
    %68 = arith.mulf %66, %66 : vector<3x8xf32>
    %69 = vector.extract_strided_slice %67 {offsets = [0, 0], sizes = [1, 8], strides = [1, 1]} : vector<3x8xf32> to vector<1x8xf32>
    %70 = vector.extract_strided_slice %67 {offsets = [1, 0], sizes = [1, 8], strides = [1, 1]} : vector<3x8xf32> to vector<1x8xf32>
    %71 = arith.addf %69, %70 : vector<1x8xf32>
    %72 = vector.extract_strided_slice %67 {offsets = [2, 0], sizes = [1, 8], strides = [1, 1]} : vector<3x8xf32> to vector<1x8xf32>
    %73 = arith.addf %71, %72 : vector<1x8xf32>
    %74 = vector.extract_strided_slice %68 {offsets = [0, 0], sizes = [1, 8], strides = [1, 1]} : vector<3x8xf32> to vector<1x8xf32>
    %75 = vector.extract_strided_slice %68 {offsets = [1, 0], sizes = [1, 8], strides = [1, 1]} : vector<3x8xf32> to vector<1x8xf32>
    %76 = arith.addf %74, %75 : vector<1x8xf32>
    %77 = vector.extract_strided_slice %68 {offsets = [2, 0], sizes = [1, 8], strides = [1, 1]} : vector<3x8xf32> to vector<1x8xf32>
    %78 = arith.addf %76, %77 : vector<1x8xf32>
    %79 = vector.shape_cast %73 : vector<1x8xf32> to vector<1x1x8xf32>
    %cst_18 = arith.constant dense<0.000000e+00> : vector<1xf32>
    %80 = vector.multi_reduction <add>, %79, %cst_18 [1, 2] : vector<1x1x8xf32> to vector<1xf32>
    %81 = vector.shape_cast %80 : vector<1xf32> to vector<1x1x1xf32>
    %82 = vector.extract %81[0, 0, 0] : f32 from vector<1x1x1xf32>
    %cst_19 = arith.constant 0.0416666679 : f32
    %83 = arith.mulf %82, %cst_19 : f32
    %84 = vector.shape_cast %78 : vector<1x8xf32> to vector<1x1x8xf32>
    %cst_20 = arith.constant dense<0.000000e+00> : vector<1xf32>
    %85 = vector.multi_reduction <add>, %84, %cst_20 [1, 2] : vector<1x1x8xf32> to vector<1xf32>
    %86 = vector.shape_cast %85 : vector<1xf32> to vector<1x1x1xf32>
    %87 = vector.extract %86[0, 0, 0] : f32 from vector<1x1x1xf32>
    %cst_21 = arith.constant 0.0416666679 : f32
    %88 = arith.mulf %87, %cst_21 : f32
    %cst_22 = arith.constant 1.000000e+00 : f32
    %89 = arith.mulf %cst_22, %83 : f32
    %90 = arith.mulf %2, %88 : f32
    %91 = arith.addf %89, %90 : f32
    %c0_23 = arith.constant 0 : index
    %92 = memref.load %arg2[%c0_23] : memref<3xf32, #tpu.memory_space<smem>>
    memref.store %91, %arg2[%c0_23] : memref<3xf32, #tpu.memory_space<smem>>
    %c1_24 = arith.constant 1 : index
    %93 = memref.load %arg2[%c1_24] : memref<3xf32, #tpu.memory_space<smem>>
    memref.store %83, %arg2[%c1_24] : memref<3xf32, #tpu.memory_space<smem>>
    %c2_25 = arith.constant 2 : index
    %94 = memref.load %arg2[%c2_25] : memref<3xf32, #tpu.memory_space<smem>>
    memref.store %88, %arg2[%c2_25] : memref<3xf32, #tpu.memory_space<smem>>
    return
  }
}

</mosaic_0001>

<llo_original>
// kernel: tpu_custom_call.1
$region0: #{tpu_custom_call.1}
  #allocation0 [shape = 'u32[]', space=smem, size = 0x4, offset = 0x4, fixed_abs, tag = 'smem constant byte address 0x4 - core index']
  #allocation1 [shape = 'u32[144,128]{1,0:T(1,128)}', space=vmem, size = 0x12000, scoped, tag = 'internal scratch']
  %s0 = inlined_call_operand.hbm [shape: f32[3], index: 0, kind: input, shape index: {}]
  %s1 = inlined_call_operand.hbm [shape: f32[5,3,8], index: 1, kind: input, shape index: {}]
  %s2 = inlined_call_operand.hbm [shape: f32[3], index: 2, kind: output, shape index: {}]
  %s3 = sld [smem:[#allocation0]]
  $region26: #{tpu_custom_call.1} parent=0
    _
  %s5 = ssub.s32 1, %s3
  %s6 = scalar_select 0, %s5, %s3
  $region1: #{tpu_custom_call.1} parent=0
    #allocation2 [shape = 'u8[512]{0}', space=smem, size = 0x200, scoped, tag = 'input window, operand 0, single buffered']
    #allocation3 [shape = 's32[1]{0}', space=sflag, size = 0x4, scoped, tag = 'scoped memory for tpu_custom_call.1']
    #allocation4 [shape = 's32[1]{0}', space=sflag, size = 0x4, scoped, tag = 'scoped memory for tpu_custom_call.1']
    #allocation5 [shape = 's32[1]{0}', space=sflag, size = 0x4, scoped, tag = 'scoped memory for tpu_custom_call.1']
    #allocation6 [shape = 'u8[10240]{0}', space=vmem, size = 0x2800, scoped, tag = 'input window, operand 1, single buffered']
    #allocation7 [shape = 'u8[512]{0}', space=smem, size = 0x200, scoped, tag = 'output window, operand 0, single buffered']
    %7 = vsyncpa [#allocation4], 0
    %8 = vsyncpa [#allocation3], 0
    %9 = vsyncpa [#allocation5], 0
    // Predicated region
    $region2: #{tpu_custom_call.1} parent=1 // pred_check
      _
    $region3: #{tpu_custom_call.1} parent=1 // pred_check_branch
      %11 = sbr.rel (0) target = $region5
    $region4: #{tpu_custom_call.1} parent=1 // pred_region
      %s13 = ssub.s32 16, 16
      %14 = vsyncadd [#allocation4], %s13
      %17 = dma.hbm_to_smem %s0, 16, [#allocation2], [#allocation4]
    $region5: #{tpu_custom_call.1} parent=1 // pred_fallthru
      _
    // Predicated region
    $region6: #{tpu_custom_call.1} parent=1 // pred_check
      _
    $region7: #{tpu_custom_call.1} parent=1 // pred_check_branch
      %19 = sbr.rel (0) target = $region9
    $region8: #{tpu_custom_call.1} parent=1 // pred_region
      %s21 = ssub.s32 320, 320
      %22 = vsyncadd [#allocation3], %s21
      %s23 = sshll.u32 [#allocation6], 4
      %s24 = int_to_ptr.vmem [resolvable:$true] %s23
      %29 = dma.hbm_to_vmem [thread:$0]  %s1, 320, %s24, [#allocation3], 64, 64, 4
    $region9: #{tpu_custom_call.1} parent=1 // pred_fallthru
      _
    // Predicated region
    $region10: #{tpu_custom_call.1} parent=1 // pred_check
      _
    $region11: #{tpu_custom_call.1} parent=1 // pred_check_branch
      %31 = sbr.rel (0) target = $region13
    $region12: #{tpu_custom_call.1} parent=1 // pred_region
      %32 = dma.done [#allocation4], 16
    $region13: #{tpu_custom_call.1} parent=1 // pred_fallthru
      _
    // Predicated region
    $region14: #{tpu_custom_call.1} parent=1 // pred_check
      _
    $region15: #{tpu_custom_call.1} parent=1 // pred_check_branch
      %34 = sbr.rel (0) target = $region17
    $region16: #{tpu_custom_call.1} parent=1 // pred_region
      %35 = dma.done [#allocation3], 320
    $region17: #{tpu_custom_call.1} parent=1 // pred_fallthru
      _
    %36 = sfence
    %s37 = sld [smem:[#allocation2]]
    %s38 = sld [smem:[#allocation2 + $0x1]]
    %s39 = sld [smem:[#allocation2 + $0x2]]
    %v40 = vld [vmem:[#allocation6] sm:$0x7]
    %s41 = scalar_lea.vmem [#allocation6], 4
    %v42 = vld [vmem:[%s41] sm:$0x7]
    %s43 = scalar_lea.vmem [#allocation6], 8
    %v44 = vld [vmem:[%s43] sm:$0x7]
    %s45 = scalar_lea.vmem [#allocation6], 12
    %v46 = vld [vmem:[%s45] sm:$0x7]
    %s47 = scalar_lea.vmem [#allocation6], 16
    %v48 = vld [vmem:[%s47] sm:$0x7]
    %v49 = vmul.f32 %v44, %v44
    %v51 = vrot.slane %v49, 1
    %v53 = vadd.f32 %v49, %v51
    %v54 = vrot.slane %v49, 2
    %v56 = vadd.f32 %v53, %v54
    %v57 = vrsqrt.pop %v56
    %v58 = vmul.f32 %v56, 0.5
    %v59 = vmul.f32 %v58, %v57
    %v60 = vmul.f32 %v59, %v57
    %v61 = vsub.f32 1.5, %v60
    %v62 = vmul.f32 %v57, %v61
    %v63 = vmul.f32 %v62, %v62
    %v64 = vmul.f32 %v63, %v62
    %v65 = vsub.f32 %v48, %v44
    %v66 = vmul.f32 %v65, %v65
    %v68 = vrot.slane %v66, 1
    %v70 = vadd.f32 %v66, %v68
    %v71 = vrot.slane %v66, 2
    %v73 = vadd.f32 %v70, %v71
    %v74 = vrsqrt.pop %v73
    %v75 = vmul.f32 %v73, 0.5
    %v76 = vmul.f32 %v75, %v74
    %v77 = vmul.f32 %v76, %v74
    %v78 = vsub.f32 1.5, %v77
    %v79 = vmul.f32 %v74, %v78
    %v80 = vmul.f32 %v79, %v79
    %v81 = vmul.f32 %v80, %v79
    %v82 = vmul.f32 %v44, 398589.2
    %v83 = vlaneseq
    %v84 = vshrl.u32 %v83, 7
    %v85 = vsub.s32 0, %v84
    %v86 = vrot.slane %v64, %v85
    %v87 = vmul.f32 %v82, %v86
    %v88 = vmul.f32 %v65, 4900.271
    %v89 = vlaneseq
    %v90 = vshrl.u32 %v89, 7
    %v91 = vsub.s32 0, %v90
    %v92 = vrot.slane %v81, %v91
    %v93 = vmul.f32 %v88, %v92
    %v94 = vadd.f32 %v87, %v93
    %v95 = vstv %s37
    %v96 = vmul.f32 %v46, %v95
    %v97 = vadd.f32 %v44, %v96
    %v98 = vstv %s38
    %v99 = vmul.f32 %v98, %v94
    %v100 = vadd.f32 %v97, %v99
    %v101 = vsub.f32 %v40, %v42
    %v102 = vsub.f32 %v40, %v100
    %v103 = vmul.f32 %v101, %v101
    %v104 = vmul.f32 %v102, %v102
    %v106 = vrot.slane %v103, 1
    %v108 = vadd.f32 %v103, %v106
    %v109 = vrot.slane %v103, 2
    %v111 = vadd.f32 %v108, %v109
    %v113 = vrot.slane %v104, 1
    %v115 = vadd.f32 %v104, %v113
    %v116 = vrot.slane %v104, 2
    %v118 = vadd.f32 %v115, %v116
    %vm119 = vcmask 57344
    %v120 = vsel %vm119, %v111, 0.0
    %121 = vadd.xlane.f32.xlu0 %v120
    %v122 = vpop.xlane.xlu0 %121
    %v123 = vrot.slane %v122, 4
    %v124 = vadd.f32 %v122, %v123
    %v125 = vrot.slane %v124, 2
    %v126 = vadd.f32 %v124, %v125
    %v127 = vrot.slane %v126, 1
    %v128 = vadd.f32 %v126, %v127
    %s129 = vtos %v128
    %s130 = smul.f32 %s129, 0.041666668
    %v131 = vsel %vm119, %v118, 0.0
    %132 = vadd.xlane.f32.xlu0 %v131
    %v133 = vpop.xlane.xlu0 %132
    %v134 = vrot.slane %v133, 4
    %v135 = vadd.f32 %v133, %v134
    %v136 = vrot.slane %v135, 2
    %v137 = vadd.f32 %v135, %v136
    %v138 = vrot.slane %v137, 1
    %v139 = vadd.f32 %v137, %v138
    %s140 = vtos %v139
    %s141 = smul.f32 %s140, 0.041666668
    %s142 = smul.f32 %s39, %s141
    %s143 = sadd.f32 %s130, %s142
    %s144 = scalar_lea.smem [#allocation7], 0
    %145 = sst [smem:[%s144]] %s143
    %s146 = scalar_lea.smem [#allocation7], 1
    %147 = sst [smem:[%s146]] %s130
    %s148 = scalar_lea.smem [#allocation7], 2
    %149 = sst [smem:[%s148]] %s141
    // Predicated region
    $region18: #{tpu_custom_call.1} parent=1 // pred_check
      _
    $region19: #{tpu_custom_call.1} parent=1 // pred_check_branch
      %151 = sbr.rel (0) target = $region21
    $region20: #{tpu_custom_call.1} parent=1 // pred_region
      %s153 = ssub.s32 16, 16
      %154 = vsyncadd [#allocation5], %s153
      %157 = dma.smem_to_hbm [#allocation7], 16, %s2, [#allocation5]
    $region21: #{tpu_custom_call.1} parent=1 // pred_fallthru
      _
    // Predicated region
    $region22: #{tpu_custom_call.1} parent=1 // pred_check
      _
    $region23: #{tpu_custom_call.1} parent=1 // pred_check_branch
      %159 = sbr.rel (0) target = $region25
    $region24: #{tpu_custom_call.1} parent=1 // pred_region
      %160 = dma.done [#allocation5], 16
    $region25: #{tpu_custom_call.1} parent=1 // pred_fallthru
      _
    %161 = sfence
    %162 = vsyncpa [#allocation3], 1
    %163 = vsyncpa [#allocation4], 1
    %164 = vsyncpa [#allocation5], 1

</llo_original>
